<compile_context>
chip_gen: v5e
topology: v5e:2x2
jax: 0.10.0
libtpu: 0.0.40
codegen_flags: <defaults>
</compile_context>

<pallas_src>
import functools

import jax
import jax.numpy as jnp
from jax import lax
from jax.experimental import pallas as pl
from jax.experimental.pallas import tpu as pltpu

EPS = 1e-8


def _pick_tile(n, target):
    """Largest multiple-of-128 divisor of n that is <= target; fall back to n."""
    if n <= target:
        return n
    t = (target // 128) * 128
    while t >= 128:
        if n % t == 0:
            return t
        t -= 128
    return n


# ---------------------------------------------------------------------------
# Kernel 1: pointwise Conv1d (kernel size 1) == per-point linear over channels.
# ---------------------------------------------------------------------------
def _pointwise_conv_kernel(x_ref, w_ref, b_ref, o_ref):
    # x_ref: (1, Cin, TL); w_ref: (Cout, Cin); b_ref: (Cout, 1); o_ref: (1, Cout, TL)
    x = x_ref[0].astype(jnp.float32)
    y = jnp.dot(w_ref[...].astype(jnp.float32), x,
                preferred_element_type=jnp.float32) + b_ref[...].astype(jnp.float32)
    o_ref[...] = y.astype(o_ref.dtype)[None]


def pointwise_conv1d(x, w, b):
    B, Cin, L = x.shape
    Cout = w.shape[0]
    TL = _pick_tile(L, 1024)
    b2 = b.reshape(Cout, 1)
    return pl.pallas_call(
        _pointwise_conv_kernel,
        out_shape=jax.ShapeDtypeStruct((B, Cout, L), x.dtype),
        grid_spec=pltpu.PrefetchScalarGridSpec(
            num_scalar_prefetch=0,
            grid=(B, L // TL),
            in_specs=[
                pl.BlockSpec((1, Cin, TL), lambda i, j: (i, 0, j)),
                pl.BlockSpec((Cout, Cin), lambda i, j: (0, 0)),
                pl.BlockSpec((Cout, 1), lambda i, j: (0, 0)),
            ],
            out_specs=pl.BlockSpec((1, Cout, TL), lambda i, j: (i, 0, j)),
        ),
        compiler_params=pltpu.CompilerParams(
            dimension_semantics=("parallel", "parallel")),
    )(x, w, b2)


# ---------------------------------------------------------------------------
# Kernel 2: fused linear_2 + kNN inverse-distance interpolation + residual add.
# ---------------------------------------------------------------------------
def _interp_kernel(xyz1_ref, xyz2t_ref, p1_ref, pts2_ref, w2_ref, b2_ref, o_ref, *, k):
    # xyz1_ref : (1, 3, M)      source point coords
    # xyz2t_ref: (1, TN, 3)     query point coords (transposed; tiny tensor)
    # p1_ref   : (1, Cout, M)   linear_1(points_1)
    # pts2_ref : (1, Cin2, TN)  points_2 tile (linear_2 fused below)
    # w2_ref   : (Cout, Cin2), b2_ref: (Cout, 1)
    # o_ref    : (1, Cout, TN)
    x1 = xyz1_ref[0].astype(jnp.float32)      # (3, M)
    x2t = xyz2t_ref[0].astype(jnp.float32)    # (TN, 3)
    p1 = p1_ref[0].astype(jnp.float32)        # (Cout, M)

    # Fused linear_2 on the points_2 tile (saves an HBM round trip of the big tensor).
    p2 = jnp.dot(w2_ref[...].astype(jnp.float32), pts2_ref[0].astype(jnp.float32),
                 preferred_element_type=jnp.float32) + b2_ref[...].astype(jnp.float32)

    # Pairwise squared distances d[n, m] = sum_c (xyz2[c, n] - xyz1[c, m])^2
    # (direct per-coordinate form: exact f32, matches the PyTorch square_distance).
    d = None
    for c in range(3):
        col = x2t[:, c:c + 1]     # (TN, 1)
        row = x1[c:c + 1, :]      # (1, M)
        diff = col - row          # (TN, M)
        sq = diff * diff
        d = sq if d is None else d + sq

    TN, M = d.shape
    lane = lax.broadcasted_iota(jnp.int32, (TN, M), 1)
    wmat = jnp.zeros((TN, M), jnp.float32)    # dense (sparse-in-values) weight matrix
    norm = jnp.zeros((TN, 1), jnp.float32)
    dwork = d
    for _ in range(k):
        dmin = jnp.min(dwork, axis=1, keepdims=True)                  # (TN, 1)
        cand = jnp.where(dwork == dmin, lane, jnp.int32(M))
        amin = jnp.min(cand, axis=1, keepdims=True)                   # leftmost argmin
        sel = lane == amin                                            # one-hot (TN, M)
        w = 1.0 / (dmin + EPS)                                        # inverse distance
        wmat = wmat + jnp.where(sel, w, 0.0)
        norm = norm + w
        dwork = jnp.where(sel, jnp.float32(jnp.inf), dwork)           # exclude & repeat
    wmat = wmat / norm                                                # normalized weights

    # Gather + weighted sum == one MXU matmul: (Cout, M) x (TN, M)^T -> (Cout, TN)
    interp = lax.dot_general(p1, wmat, (((1,), (1,)), ((), ())),
                             preferred_element_type=jnp.float32)
    o_ref[...] = (interp + p2).astype(o_ref.dtype)[None]


def _interpolate(xyz_1, xyz2t, p1, points_2, w2, b2, *, k):
    B, _, M = xyz_1.shape
    N = xyz2t.shape[1]
    Cout = p1.shape[1]
    Cin2 = points_2.shape[1]
    TN = _pick_tile(N, 512)
    b2c = b2.reshape(Cout, 1)
    kernel = functools.partial(_interp_kernel, k=k)
    return pl.pallas_call(
        kernel,
        out_shape=jax.ShapeDtypeStruct((B, Cout, N), points_2.dtype),
        grid_spec=pltpu.PrefetchScalarGridSpec(
            num_scalar_prefetch=0,
            grid=(B, N // TN),
            in_specs=[
                pl.BlockSpec((1, 3, M), lambda b, n: (b, 0, 0)),
                pl.BlockSpec((1, TN, 3), lambda b, n: (b, n, 0)),
                pl.BlockSpec((1, Cout, M), lambda b, n: (b, 0, 0)),
                pl.BlockSpec((1, Cin2, TN), lambda b, n: (b, 0, n)),
                pl.BlockSpec((Cout, Cin2), lambda b, n: (0, 0)),
                pl.BlockSpec((Cout, 1), lambda b, n: (0, 0)),
            ],
            out_specs=pl.BlockSpec((1, Cout, TN), lambda b, n: (b, 0, n)),
        ),
        compiler_params=pltpu.CompilerParams(
            dimension_semantics=("parallel", "parallel")),
    )(xyz_1, xyz2t, p1, points_2, w2, b2c)


def tu_layer_forward(xyz_1, xyz_2, points_1, points_2, w1, b1, w2, b2, k=3):
    """Equivalent of TULayer(npoint, input_dim, out_dim, k).forward(...)."""
    p1 = pointwise_conv1d(points_1, w1, b1)          # (B, Cout, M)  -- linear_1
    # xyz tensors are tiny (3 floats/point); a wrapper transpose of xyz_2 is negligible
    # and gives the kernel query coords in a column-sliceable (N, 3) layout.
    xyz2t = jnp.transpose(xyz_2, (0, 2, 1))          # (B, N, 3)
    new_points = _interpolate(xyz_1, xyz2t, p1, points_2, w2, b2, k=k)
    return xyz_2, new_points


# ---------------------------------------------------------------------------
# Pure-JAX reference (mirrors the PyTorch module).
# ---------------------------------------------------------------------------
def _reference(xyz_1, xyz_2, points_1, points_2, w1, b1, w2, b2, k=3):
    p1 = jnp.einsum("oc,bcm->bom", w1, points_1) + b1[None, :, None]
    p2 = jnp.einsum("oc,bcn->bon", w2, points_2) + b2[None, :, None]
    src = jnp.transpose(xyz_2, (0, 2, 1))            # (B, N, 3)
    dst = jnp.transpose(xyz_1, (0, 2, 1))            # (B, M, 3)
    dists = jnp.sum((src[:, :, None, :] - dst[:, None, :, :]) ** 2, axis=-1)  # (B,N,M)
    idx = jnp.argsort(dists, axis=-1)[:, :, :k]                               # (B,N,k)
    dk = jnp.take_along_axis(dists, idx, axis=-1)
    recip = 1.0 / (dk + EPS)
    weight = recip / jnp.sum(recip, axis=-1, keepdims=True)                   # (B,N,k)
    gathered = jax.vmap(lambda p, i: p[:, i])(p1, idx)                        # (B,Cout,N,k)
    interp = jnp.sum(gathered * weight[:, None, :, :], axis=-1)               # (B,Cout,N)
    return xyz_2, interp + p2


if __name__ == "__main__":
    key = jax.random.PRNGKey(0)
    k1, k2, k3, k4, k5, k6, k7, k8 = jax.random.split(key, 8)

    B = 2
    input_dim = 32   # channels of points_1
    out_dim = 16     # channels of points_2 and of the output
    M = 16           # number of coarse points (xyz_1 / points_1)
    N = 64           # number of dense points  (xyz_2 / points_2), M < N
    k = 3

    xyz_1 = jax.random.uniform(k1, (B, 3, M), dtype=jnp.float32)
    xyz_2 = jax.random.uniform(k2, (B, 3, N), dtype=jnp.float32)
    points_1 = jax.random.normal(k3, (B, input_dim, M), dtype=jnp.float32)
    points_2 = jax.random.normal(k4, (B, out_dim, N), dtype=jnp.float32)

    # Conv1d(k=1) parameters (weight squeezed from (Cout, Cin, 1) to (Cout, Cin)).
    w1 = jax.random.normal(k5, (out_dim, input_dim), dtype=jnp.float32) / jnp.sqrt(input_dim)
    b1 = 0.1 * jax.random.normal(k6, (out_dim,), dtype=jnp.float32)
    w2 = jax.random.normal(k7, (out_dim, out_dim), dtype=jnp.float32) / jnp.sqrt(out_dim)
    b2 = 0.1 * jax.random.normal(k8, (out_dim,), dtype=jnp.float32)

    new_xyz, new_points = tu_layer_forward(
        xyz_1, xyz_2, points_1, points_2, w1, b1, w2, b2, k=k)
    jax.block_until_ready(new_points)

    ref_xyz, ref_points = _reference(
        xyz_1, xyz_2, points_1, points_2, w1, b1, w2, b2, k=k)

    assert new_xyz.shape == xyz_2.shape and jnp.allclose(new_xyz, xyz_2)
    assert new_points.shape == ref_points.shape
    assert jnp.allclose(new_points, ref_points, atol=2e-3, rtol=2e-3)

    print("KERNEL_OK")
</pallas_src>

<mosaic_0001>
module attributes {stable_mosaic.version = 11 : i64} {
  func.func @_pointwise_conv_kernel(%arg0: i32, %arg1: i32, %arg2: memref<1x32x16xf32, #tpu.memory_space<vmem>>, %arg3: memref<16x32xf32, #tpu.memory_space<vmem>>, %arg4: memref<16x1xf32, #tpu.memory_space<vmem>>, %arg5: memref<1x16x16xf32, #tpu.memory_space<vmem>>) attributes {dimension_semantics = [#tpu.dimension_semantics<parallel>, #tpu.dimension_semantics<parallel>], iteration_bounds = array<i64: 2, 1>, scalar_prefetch = 0 : i64, scratch_operands = 0 : i64, tpu.core_type = #tpu.core_type<tc>, window_params = [{transform_indices = @transform_0, window_bounds = array<i64: 1, 32, 16>}, {pipeline_mode = #tpu.pipeline_mode<synchronous>, transform_indices = @transform_1, window_bounds = array<i64: 16, 32>}, {pipeline_mode = #tpu.pipeline_mode<synchronous>, transform_indices = @transform_2, window_bounds = array<i64: 16, 1>}, {transform_indices = @transform_3, window_bounds = array<i64: 1, 16, 16>}]} {
    %c0 = arith.constant 0 : index
    %c0_0 = arith.constant 0 : index
    %c0_1 = arith.constant 0 : index
    %0 = vector.load %arg2[%c0, %c0_0, %c0_1] : memref<1x32x16xf32, #tpu.memory_space<vmem>>, vector<1x32x16xf32>
    %1 = vector.shape_cast %0 : vector<1x32x16xf32> to vector<32x16xf32>
    %c0_2 = arith.constant 0 : index
    %c0_3 = arith.constant 0 : index
    %2 = vector.load %arg3[%c0_2, %c0_3] : memref<16x32xf32, #tpu.memory_space<vmem>>, vector<16x32xf32>
    %cst = arith.constant dense<0.000000e+00> : vector<16x16xf32>
    %3 = tpu.matmul %2, %1, %cst {dimension_numbers = #tpu.dot_dimension_numbers<[1], [0], [0], [1], [0, 0, 1, 1], [], []>} : vector<16x32xf32>, vector<32x16xf32>, vector<16x16xf32> -> vector<16x16xf32>
    %c0_4 = arith.constant 0 : index
    %c0_5 = arith.constant 0 : index
    %4 = vector.load %arg4[%c0_4, %c0_5] : memref<16x1xf32, #tpu.memory_space<vmem>>, vector<16x1xf32>
    %5 = vector.broadcast %4 : vector<16x1xf32> to vector<16x16xf32>
    %6 = arith.addf %3, %5 : vector<16x16xf32>
    %7 = vector.shape_cast %6 : vector<16x16xf32> to vector<1x16x16xf32>
    %c0_6 = arith.constant 0 : index
    %c0_7 = arith.constant 0 : index
    %c0_8 = arith.constant 0 : index
    %8 = vector.load %arg5[%c0_6, %c0_7, %c0_8] : memref<1x16x16xf32, #tpu.memory_space<vmem>>, vector<1x16x16xf32>
    tpu.vector_store %arg5[%c0_6, %c0_7, %c0_8], %7 {strides = array<i32>} : memref<1x16x16xf32, #tpu.memory_space<vmem>>, vector<1x16x16xf32>,
    return
  }
  func.func @transform_0(%arg0: i32, %arg1: i32) -> (i32, i32, i32) {
    %c0_i32 = arith.constant 0 : i32
    %c0_i32_0 = arith.constant 0 : i32
    return %arg0, %c0_i32, %arg1 : i32, i32, i32
  }
  func.func @transform_1(%arg0: i32, %arg1: i32) -> (i32, i32) {
    %c0_i32 = arith.constant 0 : i32
    %c0_i32_0 = arith.constant 0 : i32
    %c0_i32_1 = arith.constant 0 : i32
    return %c0_i32, %c0_i32_0 : i32, i32
  }
  func.func @transform_2(%arg0: i32, %arg1: i32) -> (i32, i32) {
    %c0_i32 = arith.constant 0 : i32
    %c0_i32_0 = arith.constant 0 : i32
    %c0_i32_1 = arith.constant 0 : i32
    return %c0_i32, %c0_i32_0 : i32, i32
  }
  func.func @transform_3(%arg0: i32, %arg1: i32) -> (i32, i32, i32) {
    %c0_i32 = arith.constant 0 : i32
    %c0_i32_0 = arith.constant 0 : i32
    return %arg0, %c0_i32, %arg1 : i32, i32, i32
  }
}

</mosaic_0001>

<llo_original>
// kernel: tpu_custom_call.1
$region0: #{tpu_custom_call.1}
  #allocation0 [shape = 'u32[]', space=smem, size = 0x4, offset = 0x4, fixed_abs, tag = 'smem constant byte address 0x4 - core index']
  #allocation1 [shape = 'u32[72,128]{1,0:T(1,128)}', space=vmem, size = 0x9000, scoped, tag = 'internal scratch']
  %s0 = inlined_call_operand.vmem [shape: f32[2,32,16], index: 0, kind: input, shape index: {}]
  %s1 = inlined_call_operand.vmem [shape: f32[16,32], index: 1, kind: input, shape index: {}]
  %s2 = inlined_call_operand.vmem [shape: f32[16,1], index: 2, kind: input, shape index: {}]
  %s3 = inlined_call_operand.hbm [shape: f32[2,16,16], index: 3, kind: output, shape index: {}]
  %s4 = sld [smem:[#allocation0]]
  $region45: #{tpu_custom_call.1} parent=0
    _
  %s6 = ssub.s32 1, %s4
  %s7 = scalar_select 0, %s6, %s4
  $region1: #{tpu_custom_call.1} parent=0
    #allocation2 [shape = 'u8[16384]{0}', space=vmem, size = 0x4000, scoped, tag = 'output window, operand 0']
    #allocation3 [shape = 's32[2]{0}', space=sflag, size = 0x8, scoped, tag = 'scoped memory for tpu_custom_call.1']
    %8 = vsyncpa [#allocation3], 0
    %s9 = scalar_lea.sflag [#allocation3], 1
    %10 = vsyncpa %s9, 0
    loop: start=0, step=1, limit=4
    $region2: #{tpu_custom_call.1} parent=1 // loop_pre_header
      _
    $region3: #{tpu_custom_call.1} parent=1 // loop_header
      %s12 = sphi 0, %s16
      %p13 = scmp.ge.s32.totalorder %s12, 4
      %s19 = sphi 0, %s31
      %s20 = sphi 0, %s27
      %s21 = sphi 0, %s19
      %s22 = sphi 0, %s20
      %s23 = sphi 0, %s21
      %s24 = sphi 0, %s22
      %s36 = sphi 0, %s38
      %s39 = sphi 0, %s36
      %s40 = sphi 0, %s39
      %s56 = sphi 0, %s40
      %s60 = sphi 0, %s60
      %s62 = sphi 0, %s60
      %s63 = sphi 0, %s62
      %s77 = sphi 0, %s63
      %s81 = sphi 0, %s81
      %s83 = sphi 0, %s81
      %s84 = sphi 0, %s83
      %s98 = sphi 0, %s84
      %s106 = sphi 0, %s108
      %s109 = sphi 0, %s106
      %s110 = sphi 0, %s109
      %s126 = sphi 0, %s110
    $region4: #{tpu_custom_call.1} parent=1 // loop_header_branch
      %15 = sbr.rel (%p13) target = $region8
    $region5: #{tpu_custom_call.1} parent=1 // loop_body
      %s17 = ssub.s32 %s12, 1
      %s18 = ssub.s32 %s12, 2
      %s25 = sadd.s32 1, %s20
      %p26 = scmp.ge.s32.totalorder %s25, 1
      %s27 = scalar_select %p26, 0, %s25
      %s28 = sadd.s32 1, %s19
      %s29 = scalar_select %p26, %s28, %s19
      %p30 = scmp.ge.s32.totalorder %s29, 2
      %s31 = scalar_select %p30, 0, %s29
      %s32 = ssub.s32 %s19, %s31
      %s33 = ssub.s32 %s20, %s27
      %s34 = sor.u32 %s32, %s33
      %p35 = scmp.eq.s32.totalorder %s34, 0
      %s37 = sadd.s32 %s36, 1
      %s38 = scalar_select %p35, %s36, %s37
      %p41 = pneg %p35
      %p42 = scmp.eq.s32.totalorder %s12, 1
      %p43 = por %p41, %p42
      %p44 = scmp.ne.s32.totalorder %s36, %s39
      %p45 = scmp.eq.s32.totalorder %s12, 0
      %p46 = por %p44, %p45
      %p47 = scmp.ne.s32.totalorder %s36, %s39
      %p48 = scmp.eq.s32.totalorder %s17, 1
      %p49 = por %p47, %p48
      %p50 = scmp.ne.s32.totalorder %s39, %s40
      %p51 = scmp.eq.s32.totalorder %s17, 0
      %p52 = por %p50, %p51
      %p53 = scmp.ne.s32.totalorder %s39, %s40
      %p54 = scmp.eq.s32.totalorder %s18, 1
      %p55 = por %p53, %p54
      %p57 = scmp.ne.s32.totalorder %s40, %s56
      %p58 = scmp.eq.s32.totalorder %s18, 0
      %p59 = por %p57, %p58
      %s61 = sadd.s32 %s60, 1
      %p64 = scmp.eq.s32.totalorder %s12, 1
      %p65 = scmp.ne.s32.totalorder %s60, %s62
      %p66 = scmp.eq.s32.totalorder %s12, 0
      %p67 = por %p65, %p66
      %p68 = scmp.ne.s32.totalorder %s60, %s62
      %p69 = scmp.eq.s32.totalorder %s17, 1
      %p70 = por %p68, %p69
      %p71 = scmp.ne.s32.totalorder %s62, %s63
      %p72 = scmp.eq.s32.totalorder %s17, 0
      %p73 = por %p71, %p72
      %p74 = scmp.ne.s32.totalorder %s62, %s63
      %p75 = scmp.eq.s32.totalorder %s18, 1
      %p76 = por %p74, %p75
      %p78 = scmp.ne.s32.totalorder %s63, %s77
      %p79 = scmp.eq.s32.totalorder %s18, 0
      %p80 = por %p78, %p79
      %s82 = sadd.s32 %s81, 1
      %p85 = scmp.eq.s32.totalorder %s12, 1
      %p86 = scmp.ne.s32.totalorder %s81, %s83
      %p87 = scmp.eq.s32.totalorder %s12, 0
      %p88 = por %p86, %p87
      %p89 = scmp.ne.s32.totalorder %s81, %s83
      %p90 = scmp.eq.s32.totalorder %s17, 1
      %p91 = por %p89, %p90
      %p92 = scmp.ne.s32.totalorder %s83, %s84
      %p93 = scmp.eq.s32.totalorder %s17, 0
      %p94 = por %p92, %p93
      %p95 = scmp.ne.s32.totalorder %s83, %s84
      %p96 = scmp.eq.s32.totalorder %s18, 1
      %p97 = por %p95, %p96
      %p99 = scmp.ne.s32.totalorder %s84, %s98
      %p100 = scmp.eq.s32.totalorder %s18, 0
      %p101 = por %p99, %p100
      %s102 = ssub.s32 %s19, %s31
      %s103 = ssub.s32 %s20, %s27
      %s104 = sor.u32 %s102, %s103
      %p105 = scmp.eq.s32.totalorder %s104, 0
      %s107 = sadd.s32 %s106, 1
      %s108 = scalar_select %p105, %s106, %s107
      %p111 = pneg %p105
      %p112 = scmp.eq.s32.totalorder %s12, 1
      %p113 = por %p111, %p112
      %p114 = scmp.ne.s32.totalorder %s106, %s109
      %p115 = scmp.eq.s32.totalorder %s12, 0
      %p116 = por %p114, %p115
      %p117 = scmp.ne.s32.totalorder %s106, %s109
      %p118 = scmp.eq.s32.totalorder %s17, 1
      %p119 = por %p117, %p118
      %p120 = scmp.ne.s32.totalorder %s109, %s110
      %p121 = scmp.eq.s32.totalorder %s17, 0
      %p122 = por %p120, %p121
      %p123 = scmp.ne.s32.totalorder %s109, %s110
      %p124 = scmp.eq.s32.totalorder %s18, 1
      %p125 = por %p123, %p124
      %p127 = scmp.ne.s32.totalorder %s110, %s126
      %p128 = scmp.eq.s32.totalorder %s18, 0
      %p129 = por %p127, %p128
      %p130 = scmp.le.s32.totalorder 1, %s12
      %p131 = scmp.lt.s32.totalorder %s12, 3
      %p132 = pnand %p130, %p131
      %p133 = pneg %p132
      // Predicated region
      $region9: #{tpu_custom_call.1} parent=5 // pred_check
        _
      $region10: #{tpu_custom_call.1} parent=5 // pred_check_branch
        %135 = sbr.rel (%p132) target = $region12
      $region11: #{tpu_custom_call.1} parent=5 // pred_region
        %s136 = ssub.s32 %s12, 1
        // Predicated region
        $region13: #{tpu_custom_call.1} parent=11 // pred_check
          %p137 = pneg %p73
        $region14: #{tpu_custom_call.1} parent=11 // pred_check_branch
          %139 = sbr.rel (%p137) target = $region16
        $region15: #{tpu_custom_call.1} parent=11 // pred_region
          _
        $region16: #{tpu_custom_call.1} parent=11 // pred_fallthru
          _
        // Predicated region
        $region17: #{tpu_custom_call.1} parent=11 // pred_check
          %p140 = pneg %p94
        $region18: #{tpu_custom_call.1} parent=11 // pred_check_branch
          %142 = sbr.rel (%p140) target = $region20
        $region19: #{tpu_custom_call.1} parent=11 // pred_region
          _
        $region20: #{tpu_custom_call.1} parent=11 // pred_fallthru
          _
      $region12: #{tpu_custom_call.1} parent=5 // pred_fallthru
        _
      %p143 = scmp.lt.s32.totalorder %s12, 2
      // Predicated region
      $region21: #{tpu_custom_call.1} parent=5 // pred_check
        %p144 = pneg %p143
      $region22: #{tpu_custom_call.1} parent=5 // pred_check_branch
        %146 = sbr.rel (%p144) target = $region24
      $region23: #{tpu_custom_call.1} parent=5 // pred_region
        // Predicated region
        $region25: #{tpu_custom_call.1} parent=23 // pred_check
          %p147 = pneg %p46
        $region26: #{tpu_custom_call.1} parent=23 // pred_check_branch
          %149 = sbr.rel (%p147) target = $region28
        $region27: #{tpu_custom_call.1} parent=23 // pred_region
          %p150 = scmp.lt.s32.totalorder %s19, 1
          %s151 = scalar_select %p150, %s19, 1
          %p152 = scmp.lt.s32.totalorder %s20, 0
          %s153 = scalar_select %p152, %s20, 0
          %s154 = smul.addr %s151, 4
          %s155 = sadd.s32 %s153, %s154
          %s156 = smul.addr %s155, 8
          %s157 = scalar_lea.vmem %s0, %s156
        $region28: #{tpu_custom_call.1} parent=23 // pred_fallthru
          _
      $region24: #{tpu_custom_call.1} parent=5 // pred_fallthru
        _
      %p158 = scmp.le.s32.totalorder 1, %s12
      %p159 = scmp.lt.s32.totalorder %s12, 3
      %p160 = pnand %p158, %p159
      %p161 = pneg %p160
      // Predicated region
      $region29: #{tpu_custom_call.1} parent=5 // pred_check
        _
      $region30: #{tpu_custom_call.1} parent=5 // pred_check_branch
        %163 = sbr.rel (%p160) target = $region32
      $region31: #{tpu_custom_call.1} parent=5 // pred_region
        %s164 = ssub.s32 %s12, 1
        %p165 = scmp.lt.s32.totalorder %s21, 1
        %s166 = scalar_select %p165, %s21, 1
        %p167 = scmp.lt.s32.totalorder %s22, 0
        %s168 = scalar_select %p167, %s22, 0
        %s169 = smul.addr %s166, 4
        %s170 = sadd.s32 %s168, %s169
        %s171 = smul.addr %s170, 8
        %s172 = scalar_lea.vmem %s0, %s171
        %p173 = pneg %p52
        %p174 = pneg %p49
        %p175 = pneg %p73
        %p176 = pneg %p70
        %p177 = pneg %p94
        %p178 = pneg %p91
        %p179 = pneg %p122
        %p180 = pneg %p119
        %s181 = sand.u32 %s109, 1
        %s182 = scalar_lea.sflag [#allocation3], %s181
        %s183 = sand.u32 %s109, 1
        %s184 = smul.addr %s183, 16
        %s185 = scalar_lea.vmem [#allocation2], %s184
        %p186 = scmp.lt.s32.totalorder %s21, 1
        %s187 = scalar_select %p186, %s21, 1
        %p188 = scmp.lt.s32.totalorder %s22, 0
        %s189 = scalar_select %p188, %s22, 0
        %s190 = smul.addr %s187, 4
        %s191 = sadd.s32 %s189, %s190
        %s192 = smul.addr %s191, 8
        %s193 = scalar_lea.vmem %s0, %s192
        %v194 = vld [vmem:[%s193] sm:$0xff]
        %v195 = vld [vmem:[%s193 + $0x8] sm:$0xff]
        %v196 = vld [vmem:[%s193 + $0x10] sm:$0xff]
        %v197 = vld [vmem:[%s193 + $0x18] sm:$0xff]
        %v198 = vld [vmem:[%s1] sm:$0xff]
        %v199 = vld [vmem:[%s1 + $0x8] sm:$0xff]
        %v200 = vld [vmem:[%s2] sm:$0xff]
        %v201 = vld [vmem:[%s2 + $0x8] sm:$0xff]
        %203 = vset.pattern.permute.xlu0 0
        %204 = vperm.xlu0 %203, %v200
        %v205 = vpop.permute.xlu0 %204
        %208 = vset.pattern.permute.xlu0 0
        %209 = vperm.xlu0 %208, %v201
        %v210 = vpop.permute.xlu0 %209
        %vm212 = vcmask 261120
        %v214 = vsel %vm212, %v198, 0
        %v217 = vsel %vm212, %v199, 0
        %219 = vmatpush.msra.mxu0 0.0
        %220 = vmatpush.msra.mxu0 0.0
        %221 = vmatpush.msra.mxu0 0.0
        %222 = vmatpush.msra.mxu0 0.0
        %223 = vmatpush.msra.mxu0 0.0
        %224 = vmatpush.msra.mxu0 0.0
        %225 = vmatpush.msra.mxu0 0.0
        %226 = vmatpush.msra.mxu0 0.0
        %227 = vmatpush.msra.mxu0 0.0
        %228 = vmatpush.msra.mxu0 0.0
        %229 = vmatpush.msra.mxu0 0.0
        %230 = vmatpush.msra.mxu0 0.0
        %231 = vmatpush.msra.mxu0 %v197
        %232 = vmatpush.msra.mxu0 %v196
        %233 = vmatpush.msra.mxu0 %v195
        %234 = vmatpush.msra.mxu0 %v194
        %235 = vmatmul.f32.gmra.mxu0 %v214
        %v236 = vpop.f32.mrf.mxu0
        %v237 = vadd.f32 %v205, %v236
        %238 = vmatmul.f32.gmra.mxu0 %v217
        %v239 = vpop.f32.mrf.mxu0
        %v240 = vadd.f32 %v210, %v239
        %241 = vdwg.mxu0
        %vm242 = vcmask 130048
        %243 = vst.msk [vmem:[%s185] sm:$0xff] %vm242, %v237
        %244 = vst.msk [vmem:[%s185 + $0x8] sm:$0xff] %vm242, %v240
        %s245 = sand.u32 %s109, 1
        %s246 = scalar_lea.sflag [#allocation3], %s245
        %s247 = sand.u32 %s109, 1
        %s248 = smul.addr %s247, 16
        %s249 = scalar_lea.vmem [#allocation2], %s248
        // Predicated region
        $region33: #{tpu_custom_call.1} parent=31 // pred_check
          %p250 = pneg %p119
        $region34: #{tpu_custom_call.1} parent=31 // pred_check_branch
          %252 = sbr.rel (%p250) target = $region36
        $region35: #{tpu_custom_call.1} parent=31 // pred_region
          %254 = vsyncadd %s246, 0
          %s255 = smul.addr %s21, 2
          %s256 = sadd.s32 %s22, %s255
          %s257 = smul.addr %s256, 8
          %s258 = scalar_lea.hbm %s3, %s257
          %s259 = sshll.u32 %s249, 4
          %s260 = int_to_ptr.vmem [resolvable:$true] %s259
          %s261 = sshll.u32 %s258, 4
          %s262 = int_to_ptr.hbm [resolvable:$true] %s261
          %267 = dma.vmem_to_hbm [thread:$0]  %s260, 256, %s262, %s246, 128, 128, 8
        $region36: #{tpu_custom_call.1} parent=31 // pred_fallthru
          _
      $region32: #{tpu_custom_call.1} parent=5 // pred_fallthru
        _
      %p268 = scmp.le.s32.totalorder 2, %s12
      // Predicated region
      $region37: #{tpu_custom_call.1} parent=5 // pred_check
        %p269 = pneg %p268
      $region38: #{tpu_custom_call.1} parent=5 // pred_check_branch
        %271 = sbr.rel (%p269) target = $region40
      $region39: #{tpu_custom_call.1} parent=5 // pred_region
        %s272 = ssub.s32 %s12, 2
        // Predicated region
        $region41: #{tpu_custom_call.1} parent=39 // pred_check
          %p273 = pneg %p125
        $region42: #{tpu_custom_call.1} parent=39 // pred_check_branch
          %275 = sbr.rel (%p273) target = $region44
        $region43: #{tpu_custom_call.1} parent=39 // pred_region
          %s276 = sand.u32 %s110, 1
          %s277 = scalar_lea.sflag [#allocation3], %s276
          %s278 = sand.u32 %s110, 1
          %s279 = smul.addr %s278, 16
          %s280 = scalar_lea.vmem [#allocation2], %s279
          %282 = dma.done %s277, 256
        $region44: #{tpu_custom_call.1} parent=39 // pred_fallthru
          _
      $region40: #{tpu_custom_call.1} parent=5 // pred_fallthru
        _
    $region6: #{tpu_custom_call.1} parent=1 // loop_footer
      %s16 = sadd.s32 1, %s12
    $region7: #{tpu_custom_call.1} parent=1 // loop_footer_branch
      %11 = sbr.rel target = $region3
    $region8: #{tpu_custom_call.1} parent=1 // loop_exit
      _
    %283 = vsyncpa [#allocation3], 1
    %s284 = scalar_lea.sflag [#allocation3], 1
    %285 = vsyncpa %s284, 1

</llo_original>
